<compile_context>
chip_gen: v6e
topology: v6e:2x2x1
jax: 0.10.0
libtpu: 0.0.40
codegen_flags: <defaults>
</compile_context>

<pallas_src>
import functools

import jax
import jax.numpy as jnp
from jax.experimental import pallas as pl
from jax.experimental.pallas import tpu as pltpu


def generator_kernel(x_ref, w1_ref, b1_ref, w2_ref, b2_ref, o_ref, *, mm_dtype):
    # Hidden layer: h = relu(x @ W1 + b1)            -> (tb, H)
    x = x_ref[...].astype(mm_dtype)                  # in-kernel bf16 cast (VPU)
    w1 = w1_ref[...].astype(mm_dtype)                # resident, tiny cast
    h = jnp.dot(x, w1, preferred_element_type=jnp.float32)
    h = jnp.maximum(h + b1_ref[...], 0.0)            # (tb, H) + (1, H), f32

    # Output layer: y = tanh(h @ W2 + b2)            -> (tb, D_out)
    w2 = w2_ref[...].astype(mm_dtype)
    y = jnp.dot(h.astype(mm_dtype), w2, preferred_element_type=jnp.float32)
    o_ref[...] = jnp.tanh(y + b2_ref[...]).astype(o_ref.dtype)


def generator_forward(x, w1, b1, w2, b2, *, tb=None, use_bf16=True, out_dtype=None):
    """x: (B, D_in); w1: (D_in, H); b1: (H,); w2: (H, D_out); b2: (D_out,)."""
    B, D_in = x.shape
    H = w1.shape[1]
    D_out = w2.shape[1]
    out_dtype = out_dtype if out_dtype is not None else x.dtype

    # Batch tile: exactly 2 grid steps (one per v7x TC; 1-2 cheap serial steps
    # on v5e/v6e).  Batch is the sublane dim -> tb only needs to be a
    # multiple of 8.
    if tb is None:
        tb = max(8, pl.cdiv(pl.cdiv(B, 2), 8) * 8)
    assert tb % 8 == 0
    Bp = pl.cdiv(B, tb) * tb                          # pad batch to whole tiles

    xp = x if Bp == B else jnp.pad(x, ((0, Bp - B), (0, 0)))
    mm_dtype = jnp.bfloat16 if use_bf16 else x.dtype

    b1r = b1.reshape(1, H).astype(jnp.float32)        # f32 elementwise tail
    b2r = b2.reshape(1, D_out).astype(jnp.float32)

    def _nbytes(a):
        return a.size * a.dtype.itemsize

    cost = pl.CostEstimate(
        flops=2 * Bp * (D_in * H + H * D_out),
        transcendentals=Bp * D_out,                   # tanh
        bytes_accessed=(_nbytes(xp) + _nbytes(w1) + _nbytes(w2)
                        + _nbytes(b1r) + _nbytes(b2r)
                        + Bp * D_out * jnp.dtype(out_dtype).itemsize),
    )

    out = pl.pallas_call(
        functools.partial(generator_kernel, mm_dtype=mm_dtype),
        out_shape=jax.ShapeDtypeStruct((Bp, D_out), out_dtype),
        grid_spec=pltpu.PrefetchScalarGridSpec(
            num_scalar_prefetch=0,
            grid=(Bp // tb,),
            in_specs=[
                pl.BlockSpec((tb, D_in), lambda i: (i, 0)),   # x tile (natural layout)
                pl.BlockSpec((D_in, H), lambda i: (0, 0)),    # W1 (resident)
                pl.BlockSpec((1, H), lambda i: (0, 0)),       # b1 (resident)
                pl.BlockSpec((H, D_out), lambda i: (0, 0)),   # W2 (resident)
                pl.BlockSpec((1, D_out), lambda i: (0, 0)),   # b2 (resident)
            ],
            out_specs=pl.BlockSpec((tb, D_out), lambda i: (i, 0)),
        ),
        compiler_params=pltpu.CompilerParams(
            dimension_semantics=("parallel",)),
        cost_estimate=cost,
    )(xp, w1, b1r, w2, b2r)

    return out if Bp == B else out[:B]                # (B, D_out)


def reference_forward(x, w1, b1, w2, b2, *, use_bf16=True):
    mm_dtype = jnp.bfloat16 if use_bf16 else x.dtype
    h = jnp.dot(x.astype(mm_dtype), w1.astype(mm_dtype),
                preferred_element_type=jnp.float32)
    h = jnp.maximum(h + b1.astype(jnp.float32), 0.0)
    y = jnp.dot(h.astype(mm_dtype), w2.astype(mm_dtype),
                preferred_element_type=jnp.float32)
    return jnp.tanh(y + b2.astype(jnp.float32)).astype(x.dtype)


if __name__ == "__main__":
    # Generator(input_size, hidden_size=128, output_size).
    batch = 256
    input_size = 32
    hidden_size = 128
    output_size = 32

    key = jax.random.PRNGKey(0)
    kx, kw1, kb1, kw2, kb2 = jax.random.split(key, 5)

    x = jax.random.normal(kx, (batch, input_size), dtype=jnp.float32)

    # Deterministic init mimicking nn.Linear's uniform(-1/sqrt(fan_in), ...)
    bound1 = 1.0 / jnp.sqrt(jnp.float32(input_size))
    w1 = jax.random.uniform(kw1, (input_size, hidden_size),
                            minval=-bound1, maxval=bound1, dtype=jnp.float32)
    b1 = jax.random.uniform(kb1, (hidden_size,),
                            minval=-bound1, maxval=bound1, dtype=jnp.float32)
    bound2 = 1.0 / jnp.sqrt(jnp.float32(hidden_size))
    w2 = jax.random.uniform(kw2, (hidden_size, output_size),
                            minval=-bound2, maxval=bound2, dtype=jnp.float32)
    b2 = jax.random.uniform(kb2, (output_size,),
                            minval=-bound2, maxval=bound2, dtype=jnp.float32)

    # 1) f32 path: near-exact check vs. the f32 reference (same default
    #    matmul precision on both sides).
    out_f32 = jax.block_until_ready(
        generator_forward(x, w1, b1, w2, b2, use_bf16=False))
    ref_f32 = reference_forward(x, w1, b1, w2, b2, use_bf16=False)
    assert out_f32.shape == (batch, output_size)
    assert jnp.allclose(out_f32, ref_f32, atol=1e-4, rtol=1e-4), \
        "f32 path mismatch vs reference"

    # 2) bf16 matmul path (default): compare against a reference applying the
    #    same bf16 operand casts.
    out_bf16 = jax.block_until_ready(generator_forward(x, w1, b1, w2, b2))
    ref_bf16 = reference_forward(x, w1, b1, w2, b2, use_bf16=True)
    assert out_bf16.shape == (batch, output_size)
    assert jnp.allclose(out_bf16, ref_bf16, atol=2e-2, rtol=2e-2), \
        "bf16 path mismatch vs bf16 reference"

    print("KERNEL_OK")
</pallas_src>

<mosaic_0001>
module attributes {stable_mosaic.version = 11 : i64} {
  func.func @generator_kernel(%arg0: i32, %arg1: memref<128x32xf32, #tpu.memory_space<vmem>>, %arg2: memref<32x128xf32, #tpu.memory_space<vmem>>, %arg3: memref<1x128xf32, #tpu.memory_space<vmem>>, %arg4: memref<128x32xf32, #tpu.memory_space<vmem>>, %arg5: memref<1x32xf32, #tpu.memory_space<vmem>>, %arg6: memref<128x32xf32, #tpu.memory_space<vmem>>) attributes {dimension_semantics = [#tpu.dimension_semantics<parallel>], iteration_bounds = array<i64: 2>, scalar_prefetch = 0 : i64, scratch_operands = 0 : i64, tpu.core_type = #tpu.core_type<tc>, window_params = [{transform_indices = @transform_0, window_bounds = array<i64: 128, 32>}, {pipeline_mode = #tpu.pipeline_mode<synchronous>, transform_indices = @transform_1, window_bounds = array<i64: 32, 128>}, {pipeline_mode = #tpu.pipeline_mode<synchronous>, transform_indices = @transform_2, window_bounds = array<i64: 1, 128>}, {pipeline_mode = #tpu.pipeline_mode<synchronous>, transform_indices = @transform_3, window_bounds = array<i64: 128, 32>}, {pipeline_mode = #tpu.pipeline_mode<synchronous>, transform_indices = @transform_4, window_bounds = array<i64: 1, 32>}, {transform_indices = @transform_5, window_bounds = array<i64: 128, 32>}]} {
    %c0 = arith.constant 0 : index
    %c0_0 = arith.constant 0 : index
    %0 = vector.load %arg1[%c0, %c0_0] : memref<128x32xf32, #tpu.memory_space<vmem>>, vector<128x32xf32>
    %c0_1 = arith.constant 0 : index
    %c0_2 = arith.constant 0 : index
    %1 = vector.load %arg2[%c0_1, %c0_2] : memref<32x128xf32, #tpu.memory_space<vmem>>, vector<32x128xf32>
    %cst = arith.constant dense<0.000000e+00> : vector<128x128xf32>
    %2 = tpu.matmul %0, %1, %cst {dimension_numbers = #tpu.dot_dimension_numbers<[1], [0], [0], [1], [0, 0, 1, 1], [], []>} : vector<128x32xf32>, vector<32x128xf32>, vector<128x128xf32> -> vector<128x128xf32>
    %c0_3 = arith.constant 0 : index
    %c0_4 = arith.constant 0 : index
    %3 = vector.load %arg3[%c0_3, %c0_4] : memref<1x128xf32, #tpu.memory_space<vmem>>, vector<1x128xf32>
    %4 = vector.broadcast %3 : vector<1x128xf32> to vector<128x128xf32>
    %5 = arith.addf %2, %4 : vector<128x128xf32>
    %cst_5 = arith.constant 0.000000e+00 : f32
    %6 = vector.broadcast %cst_5 : f32 to vector<128x128xf32>
    %7 = arith.maximumf %5, %6 : vector<128x128xf32>
    %c0_6 = arith.constant 0 : index
    %c0_7 = arith.constant 0 : index
    %8 = vector.load %arg4[%c0_6, %c0_7] : memref<128x32xf32, #tpu.memory_space<vmem>>, vector<128x32xf32>
    %cst_8 = arith.constant dense<0.000000e+00> : vector<128x32xf32>
    %9 = tpu.matmul %7, %8, %cst_8 {dimension_numbers = #tpu.dot_dimension_numbers<[1], [0], [0], [1], [0, 0, 1, 1], [], []>} : vector<128x128xf32>, vector<128x32xf32>, vector<128x32xf32> -> vector<128x32xf32>
    %c0_9 = arith.constant 0 : index
    %c0_10 = arith.constant 0 : index
    %10 = vector.load %arg5[%c0_9, %c0_10] : memref<1x32xf32, #tpu.memory_space<vmem>>, vector<1x32xf32>
    %11 = vector.broadcast %10 : vector<1x32xf32> to vector<128x32xf32>
    %12 = arith.addf %9, %11 : vector<128x32xf32>
    %13 = math.tanh %12 : vector<128x32xf32>
    %c0_11 = arith.constant 0 : index
    %c0_12 = arith.constant 0 : index
    %14 = vector.load %arg6[%c0_11, %c0_12] : memref<128x32xf32, #tpu.memory_space<vmem>>, vector<128x32xf32>
    tpu.vector_store %arg6[%c0_11, %c0_12], %13 {strides = array<i32>} : memref<128x32xf32, #tpu.memory_space<vmem>>, vector<128x32xf32>,
    return
  }
  func.func @transform_0(%arg0: i32) -> (i32, i32) {
    %c0_i32 = arith.constant 0 : i32
    %c0_i32_0 = arith.constant 0 : i32
    return %arg0, %c0_i32 : i32, i32
  }
  func.func @transform_1(%arg0: i32) -> (i32, i32) {
    %c0_i32 = arith.constant 0 : i32
    %c0_i32_0 = arith.constant 0 : i32
    %c0_i32_1 = arith.constant 0 : i32
    return %c0_i32, %c0_i32_0 : i32, i32
  }
  func.func @transform_2(%arg0: i32) -> (i32, i32) {
    %c0_i32 = arith.constant 0 : i32
    %c0_i32_0 = arith.constant 0 : i32
    %c0_i32_1 = arith.constant 0 : i32
    return %c0_i32, %c0_i32_0 : i32, i32
  }
  func.func @transform_3(%arg0: i32) -> (i32, i32) {
    %c0_i32 = arith.constant 0 : i32
    %c0_i32_0 = arith.constant 0 : i32
    %c0_i32_1 = arith.constant 0 : i32
    return %c0_i32, %c0_i32_0 : i32, i32
  }
  func.func @transform_4(%arg0: i32) -> (i32, i32) {
    %c0_i32 = arith.constant 0 : i32
    %c0_i32_0 = arith.constant 0 : i32
    %c0_i32_1 = arith.constant 0 : i32
    return %c0_i32, %c0_i32_0 : i32, i32
  }
  func.func @transform_5(%arg0: i32) -> (i32, i32) {
    %c0_i32 = arith.constant 0 : i32
    %c0_i32_0 = arith.constant 0 : i32
    return %arg0, %c0_i32 : i32, i32
  }
}

</mosaic_0001>

<llo_original>
// kernel: tpu_custom_call.1
$region0: #{tpu_custom_call.1}
  #allocation0 [shape = 'u32[]', space=smem, size = 0x4, offset = 0x4, fixed_abs, tag = 'smem constant byte address 0x4 - core index']
  #allocation1 [shape = 'u32[144,128]{1,0:T(1,128)}', space=vmem, size = 0x12000, scoped, tag = 'internal scratch']
  %s0 = inlined_call_operand.vmem [shape: f32[256,32], index: 0, kind: input, shape index: {}]
  %s1 = inlined_call_operand.vmem [shape: f32[32,128], index: 1, kind: input, shape index: {}]
  %s2 = inlined_call_operand.vmem [shape: f32[1,128], index: 2, kind: input, shape index: {}]
  %s3 = inlined_call_operand.vmem [shape: f32[128,32], index: 3, kind: input, shape index: {}]
  %s4 = inlined_call_operand.vmem [shape: f32[1,32], index: 4, kind: input, shape index: {}]
  %s5 = inlined_call_operand.vmem [shape: f32[256,32], index: 5, kind: output, shape index: {}]
  %s6 = sld [smem:[#allocation0]]
  $region53: #{tpu_custom_call.1} parent=0
    _
  %s8 = ssub.s32 1, %s6
  %s9 = scalar_select 0, %s8, %s6
  loop: start=0, step=1, limit=4
  $region2: #{tpu_custom_call.1} parent=0 // loop_pre_header
    _
  $region3: #{tpu_custom_call.1} parent=0 // loop_header
    %s11 = sphi 0, %s15
    %p12 = scmp.ge.s32.totalorder %s11, 4
    %s21 = sphi 0, %s23
    %s24 = sphi 0, %s21
    %s25 = sphi 0, %s24
    %s41 = sphi 0, %s25
    %s45 = sphi 0, %s45
    %s47 = sphi 0, %s45
    %s48 = sphi 0, %s47
    %s62 = sphi 0, %s48
    %s66 = sphi 0, %s66
    %s68 = sphi 0, %s66
    %s69 = sphi 0, %s68
    %s83 = sphi 0, %s69
    %s87 = sphi 0, %s87
    %s89 = sphi 0, %s87
    %s90 = sphi 0, %s89
    %s104 = sphi 0, %s90
    %s108 = sphi 0, %s108
    %s110 = sphi 0, %s108
    %s111 = sphi 0, %s110
    %s125 = sphi 0, %s111
    %s131 = sphi 0, %s133
    %s134 = sphi 0, %s131
    %s135 = sphi 0, %s134
    %s151 = sphi 0, %s135
  $region4: #{tpu_custom_call.1} parent=0 // loop_header_branch
    %14 = sbr.rel (%p12) target = $region8
  $region5: #{tpu_custom_call.1} parent=0 // loop_body
    %s16 = ssub.s32 %s11, 1
    %s17 = ssub.s32 %s11, 2
    %s18 = sadd.s32 %s11, 1
    %s19 = ssub.s32 %s11, %s18
    %p20 = scmp.eq.s32.totalorder %s19, 0
    %s22 = sadd.s32 %s21, 1
    %s23 = scalar_select %p20, %s21, %s22
    %p26 = pneg %p20
    %p27 = scmp.eq.s32.totalorder %s11, 1
    %p28 = por %p26, %p27
    %p29 = scmp.ne.s32.totalorder %s21, %s24
    %p30 = scmp.eq.s32.totalorder %s11, 0
    %p31 = por %p29, %p30
    %p32 = scmp.ne.s32.totalorder %s21, %s24
    %p33 = scmp.eq.s32.totalorder %s16, 1
    %p34 = por %p32, %p33
    %p35 = scmp.ne.s32.totalorder %s24, %s25
    %p36 = scmp.eq.s32.totalorder %s16, 0
    %p37 = por %p35, %p36
    %p38 = scmp.ne.s32.totalorder %s24, %s25
    %p39 = scmp.eq.s32.totalorder %s17, 1
    %p40 = por %p38, %p39
    %p42 = scmp.ne.s32.totalorder %s25, %s41
    %p43 = scmp.eq.s32.totalorder %s17, 0
    %p44 = por %p42, %p43
    %s46 = sadd.s32 %s45, 1
    %p49 = scmp.eq.s32.totalorder %s11, 1
    %p50 = scmp.ne.s32.totalorder %s45, %s47
    %p51 = scmp.eq.s32.totalorder %s11, 0
    %p52 = por %p50, %p51
    %p53 = scmp.ne.s32.totalorder %s45, %s47
    %p54 = scmp.eq.s32.totalorder %s16, 1
    %p55 = por %p53, %p54
    %p56 = scmp.ne.s32.totalorder %s47, %s48
    %p57 = scmp.eq.s32.totalorder %s16, 0
    %p58 = por %p56, %p57
    %p59 = scmp.ne.s32.totalorder %s47, %s48
    %p60 = scmp.eq.s32.totalorder %s17, 1
    %p61 = por %p59, %p60
    %p63 = scmp.ne.s32.totalorder %s48, %s62
    %p64 = scmp.eq.s32.totalorder %s17, 0
    %p65 = por %p63, %p64
    %s67 = sadd.s32 %s66, 1
    %p70 = scmp.eq.s32.totalorder %s11, 1
    %p71 = scmp.ne.s32.totalorder %s66, %s68
    %p72 = scmp.eq.s32.totalorder %s11, 0
    %p73 = por %p71, %p72
    %p74 = scmp.ne.s32.totalorder %s66, %s68
    %p75 = scmp.eq.s32.totalorder %s16, 1
    %p76 = por %p74, %p75
    %p77 = scmp.ne.s32.totalorder %s68, %s69
    %p78 = scmp.eq.s32.totalorder %s16, 0
    %p79 = por %p77, %p78
    %p80 = scmp.ne.s32.totalorder %s68, %s69
    %p81 = scmp.eq.s32.totalorder %s17, 1
    %p82 = por %p80, %p81
    %p84 = scmp.ne.s32.totalorder %s69, %s83
    %p85 = scmp.eq.s32.totalorder %s17, 0
    %p86 = por %p84, %p85
    %s88 = sadd.s32 %s87, 1
    %p91 = scmp.eq.s32.totalorder %s11, 1
    %p92 = scmp.ne.s32.totalorder %s87, %s89
    %p93 = scmp.eq.s32.totalorder %s11, 0
    %p94 = por %p92, %p93
    %p95 = scmp.ne.s32.totalorder %s87, %s89
    %p96 = scmp.eq.s32.totalorder %s16, 1
    %p97 = por %p95, %p96
    %p98 = scmp.ne.s32.totalorder %s89, %s90
    %p99 = scmp.eq.s32.totalorder %s16, 0
    %p100 = por %p98, %p99
    %p101 = scmp.ne.s32.totalorder %s89, %s90
    %p102 = scmp.eq.s32.totalorder %s17, 1
    %p103 = por %p101, %p102
    %p105 = scmp.ne.s32.totalorder %s90, %s104
    %p106 = scmp.eq.s32.totalorder %s17, 0
    %p107 = por %p105, %p106
    %s109 = sadd.s32 %s108, 1
    %p112 = scmp.eq.s32.totalorder %s11, 1
    %p113 = scmp.ne.s32.totalorder %s108, %s110
    %p114 = scmp.eq.s32.totalorder %s11, 0
    %p115 = por %p113, %p114
    %p116 = scmp.ne.s32.totalorder %s108, %s110
    %p117 = scmp.eq.s32.totalorder %s16, 1
    %p118 = por %p116, %p117
    %p119 = scmp.ne.s32.totalorder %s110, %s111
    %p120 = scmp.eq.s32.totalorder %s16, 0
    %p121 = por %p119, %p120
    %p122 = scmp.ne.s32.totalorder %s110, %s111
    %p123 = scmp.eq.s32.totalorder %s17, 1
    %p124 = por %p122, %p123
    %p126 = scmp.ne.s32.totalorder %s111, %s125
    %p127 = scmp.eq.s32.totalorder %s17, 0
    %p128 = por %p126, %p127
    %s129 = ssub.s32 %s11, %s18
    %p130 = scmp.eq.s32.totalorder %s129, 0
    %s132 = sadd.s32 %s131, 1
    %s133 = scalar_select %p130, %s131, %s132
    %p136 = pneg %p130
    %p137 = scmp.eq.s32.totalorder %s11, 1
    %p138 = por %p136, %p137
    %p139 = scmp.ne.s32.totalorder %s131, %s134
    %p140 = scmp.eq.s32.totalorder %s11, 0
    %p141 = por %p139, %p140
    %p142 = scmp.ne.s32.totalorder %s131, %s134
    %p143 = scmp.eq.s32.totalorder %s16, 1
    %p144 = por %p142, %p143
    %p145 = scmp.ne.s32.totalorder %s134, %s135
    %p146 = scmp.eq.s32.totalorder %s16, 0
    %p147 = por %p145, %p146
    %p148 = scmp.ne.s32.totalorder %s134, %s135
    %p149 = scmp.eq.s32.totalorder %s17, 1
    %p150 = por %p148, %p149
    %p152 = scmp.ne.s32.totalorder %s135, %s151
    %p153 = scmp.eq.s32.totalorder %s17, 0
    %p154 = por %p152, %p153
    %p155 = scmp.le.s32.totalorder 1, %s11
    %p156 = scmp.lt.s32.totalorder %s11, 3
    %p157 = pnand %p155, %p156
    %p158 = pneg %p157
    // Predicated region
    $region9: #{tpu_custom_call.1} parent=5 // pred_check
      _
    $region10: #{tpu_custom_call.1} parent=5 // pred_check_branch
      %160 = sbr.rel (%p157) target = $region12
    $region11: #{tpu_custom_call.1} parent=5 // pred_region
      %s161 = ssub.s32 %s11, 1
      // Predicated region
      $region13: #{tpu_custom_call.1} parent=11 // pred_check
        %p162 = pneg %p58
      $region14: #{tpu_custom_call.1} parent=11 // pred_check_branch
        %164 = sbr.rel (%p162) target = $region16
      $region15: #{tpu_custom_call.1} parent=11 // pred_region
        _
      $region16: #{tpu_custom_call.1} parent=11 // pred_fallthru
        _
      // Predicated region
      $region17: #{tpu_custom_call.1} parent=11 // pred_check
        %p165 = pneg %p79
      $region18: #{tpu_custom_call.1} parent=11 // pred_check_branch
        %167 = sbr.rel (%p165) target = $region20
      $region19: #{tpu_custom_call.1} parent=11 // pred_region
        _
      $region20: #{tpu_custom_call.1} parent=11 // pred_fallthru
        _
      // Predicated region
      $region21: #{tpu_custom_call.1} parent=11 // pred_check
        %p168 = pneg %p100
      $region22: #{tpu_custom_call.1} parent=11 // pred_check_branch
        %170 = sbr.rel (%p168) target = $region24
      $region23: #{tpu_custom_call.1} parent=11 // pred_region
        _
      $region24: #{tpu_custom_call.1} parent=11 // pred_fallthru
        _
      // Predicated region
      $region25: #{tpu_custom_call.1} parent=11 // pred_check
        %p171 = pneg %p121
      $region26: #{tpu_custom_call.1} parent=11 // pred_check_branch
        %173 = sbr.rel (%p171) target = $region28
      $region27: #{tpu_custom_call.1} parent=11 // pred_region
        _
      $region28: #{tpu_custom_call.1} parent=11 // pred_fallthru
        _
    $region12: #{tpu_custom_call.1} parent=5 // pred_fallthru
      _
    %p174 = scmp.lt.s32.totalorder %s11, 2
    // Predicated region
    $region29: #{tpu_custom_call.1} parent=5 // pred_check
      %p175 = pneg %p174
    $region30: #{tpu_custom_call.1} parent=5 // pred_check_branch
      %177 = sbr.rel (%p175) target = $region32
    $region31: #{tpu_custom_call.1} parent=5 // pred_region
      // Predicated region
      $region33: #{tpu_custom_call.1} parent=31 // pred_check
        %p178 = pneg %p31
      $region34: #{tpu_custom_call.1} parent=31 // pred_check_branch
        %180 = sbr.rel (%p178) target = $region36
      $region35: #{tpu_custom_call.1} parent=31 // pred_region
        %s181 = smul.u32 16, %s11
        %p182 = scmp.lt.s32.totalorder %s181, 31
        %s183 = scalar_select %p182, %s181, 31
        %s184 = smul.addr %s183, 8
        %s185 = scalar_lea.vmem %s0, %s184
        %s186 = smul.u32 16, %s11
      $region36: #{tpu_custom_call.1} parent=31 // pred_fallthru
        _
    $region32: #{tpu_custom_call.1} parent=5 // pred_fallthru
      _
    %p187 = scmp.le.s32.totalorder 1, %s11
    %p188 = scmp.lt.s32.totalorder %s11, 3
    %p189 = pnand %p187, %p188
    %p190 = pneg %p189
    // Predicated region
    $region37: #{tpu_custom_call.1} parent=5 // pred_check
      _
    $region38: #{tpu_custom_call.1} parent=5 // pred_check_branch
      %192 = sbr.rel (%p189) target = $region40
    $region39: #{tpu_custom_call.1} parent=5 // pred_region
      %s193 = ssub.s32 %s11, 1
      %s194 = smul.u32 16, %s16
      %p195 = scmp.lt.s32.totalorder %s194, 31
      %s196 = scalar_select %p195, %s194, 31
      %s197 = smul.addr %s196, 8
      %s198 = scalar_lea.vmem %s0, %s197
      %p199 = pneg %p37
      %p200 = pneg %p34
      %p201 = pneg %p58
      %p202 = pneg %p55
      %p203 = pneg %p79
      %p204 = pneg %p76
      %p205 = pneg %p100
      %p206 = pneg %p97
      %p207 = pneg %p121
      %p208 = pneg %p118
      %p209 = pneg %p147
      %p210 = pneg %p144
      %s211 = smul.u32 16, %s16
      %p212 = scmp.lt.s32.totalorder %s211, 31
      %s213 = scalar_select %p212, %s211, 31
      %s214 = smul.addr %s213, 8
      %s215 = scalar_lea.vmem %s5, %s214
      %s216 = smul.u32 16, %s16
      %p217 = scmp.lt.s32.totalorder %s216, 31
      %s218 = scalar_select %p217, %s216, 31
      %s219 = smul.addr %s218, 8
      %s220 = scalar_lea.vmem %s0, %s219
      %s221 = smul.u32 16, %s16
      %s222 = smul.u32 16, %s16
      %p223 = scmp.lt.s32.totalorder %s222, 31
      %s224 = scalar_select %p223, %s222, 31
      %s225 = smul.addr %s224, 8
      %s226 = scalar_lea.vmem %s5, %s225
      %s227 = smul.u32 16, %s16
      %v228 = vld [vmem:[%s220] sm:$0xff]
      %v229 = vld [vmem:[%s220 + $0x8] sm:$0xff]
      %v230 = vld [vmem:[%s220 + $0x10] sm:$0xff]
      %v231 = vld [vmem:[%s220 + $0x18] sm:$0xff]
      %v232 = vld [vmem:[%s220 + $0x20] sm:$0xff]
      %v233 = vld [vmem:[%s220 + $0x28] sm:$0xff]
      %v234 = vld [vmem:[%s220 + $0x30] sm:$0xff]
      %v235 = vld [vmem:[%s220 + $0x38] sm:$0xff]
      %v236 = vld [vmem:[%s220 + $0x40] sm:$0xff]
      %v237 = vld [vmem:[%s220 + $0x48] sm:$0xff]
      %v238 = vld [vmem:[%s220 + $0x50] sm:$0xff]
      %v239 = vld [vmem:[%s220 + $0x58] sm:$0xff]
      %v240 = vld [vmem:[%s220 + $0x60] sm:$0xff]
      %v241 = vld [vmem:[%s220 + $0x68] sm:$0xff]
      %v242 = vld [vmem:[%s220 + $0x70] sm:$0xff]
      %v243 = vld [vmem:[%s220 + $0x78] sm:$0xff]
      %v244 = vld [vmem:[%s1] sm:$0xff]
      %v245 = vld [vmem:[%s1 + $0x8] sm:$0xff]
      %v246 = vld [vmem:[%s1 + $0x10] sm:$0xff]
      %v247 = vld [vmem:[%s1 + $0x18] sm:$0xff]
      %v248 = vld [vmem:[%s2] sm:$0x1]
      %v250 = vlaneseq
      %v251 = vshrl.u32 %v250, 7
      %v252 = vsub.s32 0, %v251
      %v253 = vrot.slane %v248, %v252
      %vm255 = vcmask 261120
      %v257 = vsel %vm255, %v228, 0
      %v260 = vsel %vm255, %v229, 0
      %v263 = vsel %vm255, %v230, 0
      %v266 = vsel %vm255, %v231, 0
      %v269 = vsel %vm255, %v232, 0
      %v272 = vsel %vm255, %v233, 0
      %v275 = vsel %vm255, %v234, 0
      %v278 = vsel %vm255, %v235, 0
      %v281 = vsel %vm255, %v236, 0
      %v284 = vsel %vm255, %v237, 0
      %v287 = vsel %vm255, %v238, 0
      %v290 = vsel %vm255, %v239, 0
      %v293 = vsel %vm255, %v240, 0
      %v296 = vsel %vm255, %v241, 0
      %v299 = vsel %vm255, %v242, 0
      %v302 = vsel %vm255, %v243, 0
      %304 = vmatprep.subr.mxu0 0.0
      %305 = vmatpush1.msra.mxu0 0.0
      %306 = vmatprep.subr.mxu0 0.0
      %307 = vmatpush1.msra.mxu0 0.0
      %308 = vmatprep.subr.mxu0 0.0
      %309 = vmatpush1.msra.mxu0 0.0
      %310 = vmatprep.subr.mxu0 0.0
      %311 = vmatpush1.msra.mxu0 0.0
      %312 = vmatprep.subr.mxu0 0.0
      %313 = vmatpush1.msra.mxu0 0.0
      %314 = vmatprep.subr.mxu0 0.0
      %315 = vmatpush1.msra.mxu0 0.0
      %316 = vmatprep.subr.mxu0 0.0
      %317 = vmatpush1.msra.mxu0 0.0
      %318 = vmatprep.subr.mxu0 0.0
      %319 = vmatpush1.msra.mxu0 0.0
      %320 = vmatprep.subr.mxu0 0.0
      %321 = vmatpush1.msra.mxu0 0.0
      %322 = vmatprep.subr.mxu0 0.0
      %323 = vmatpush1.msra.mxu0 0.0
      %324 = vmatprep.subr.mxu0 0.0
      %325 = vmatpush1.msra.mxu0 0.0
      %326 = vmatprep.subr.mxu0 0.0
      %327 = vmatpush1.msra.mxu0 0.0
      %328 = vmatprep.subr.mxu0 0.0
      %329 = vmatpush1.msra.mxu0 %v247
      %330 = vmatprep.subr.mxu0 0.0
      %331 = vmatpush1.msra.mxu0 %v246
      %332 = vmatprep.subr.mxu0 0.0
      %333 = vmatpush1.msra.mxu0 %v245
      %334 = vmatprep.subr.mxu0 0.0
      %335 = vmatpush1.msra.mxu0 %v244
      %336 = vmatprep.subr.mxu0 0.0
      %337 = vmatpush2.msra.mxu0 0.0
      %338 = vmatprep.subr.mxu0 0.0
      %339 = vmatpush2.msra.mxu0 0.0
      %340 = vmatprep.subr.mxu0 0.0
      %341 = vmatpush2.msra.mxu0 0.0
      %342 = vmatprep.subr.mxu0 0.0
      %343 = vmatpush2.msra.mxu0 0.0
      %344 = vmatprep.subr.mxu0 0.0
      %345 = vmatpush2.msra.mxu0 0.0
      %346 = vmatprep.subr.mxu0 0.0
      %347 = vmatpush2.msra.mxu0 0.0
      %348 = vmatprep.subr.mxu0 0.0
      %349 = vmatpush2.msra.mxu0 0.0
      %350 = vmatprep.subr.mxu0 0.0
      %351 = vmatpush2.msra.mxu0 0.0
      %352 = vmatprep.subr.mxu0 0.0
      %353 = vmatpush2.msra.mxu0 0.0
      %354 = vmatprep.subr.mxu0 0.0
      %355 = vmatpush2.msra.mxu0 0.0
      %356 = vmatprep.subr.mxu0 0.0
      %357 = vmatpush2.msra.mxu0 0.0
      %358 = vmatprep.subr.mxu0 0.0
      %359 = vmatpush2.msra.mxu0 0.0
      %360 = vmatprep.subr.mxu0 0.0
      %361 = vmatpush2.msra.mxu0 0.0
      %362 = vmatprep.subr.mxu0 0.0
      %363 = vmatpush2.msra.mxu0 0.0
      %364 = vmatprep.subr.mxu0 0.0
      %365 = vmatpush2.msra.mxu0 0.0
      %366 = vmatprep.subr.mxu0 0.0
      %367 = vmatpush2.msra.mxu0 0.0
      %368 = vmatprep.mubr.f32.mxu0 0.0
      %369 = vmatmul.mubr.f32.gmra.mxu0 %v257
      %v370 = vpop.f32.mrf.mxu0
      %v371 = vadd.f32 %v253, %v370
      %v372 = vpop.f32.mrf.mxu0
      %373 = vmatprep.mubr.f32.mxu0 0.0
      %374 = vmatmul.mubr.f32.gmra.mxu0 %v260
      %v375 = vpop.f32.mrf.mxu0
      %v376 = vadd.f32 %v253, %v375
      %v377 = vpop.f32.mrf.mxu0
      %378 = vmatprep.mubr.f32.mxu0 0.0
      %379 = vmatmul.mubr.f32.gmra.mxu0 %v263
      %v380 = vpop.f32.mrf.mxu0
      %v381 = vadd.f32 %v253, %v380
      %v382 = vpop.f32.mrf.mxu0
      %383 = vmatprep.mubr.f32.mxu0 0.0
      %384 = vmatmul.mubr.f32.gmra.mxu0 %v266
      %v385 = vpop.f32.mrf.mxu0
      %v386 = vadd.f32 %v253, %v385
      %v387 = vpop.f32.mrf.mxu0
      %388 = vmatprep.mubr.f32.mxu0 0.0
      %389 = vmatmul.mubr.f32.gmra.mxu0 %v269
      %v390 = vpop.f32.mrf.mxu0
      %v391 = vadd.f32 %v253, %v390
      %v392 = vpop.f32.mrf.mxu0
      %393 = vmatprep.mubr.f32.mxu0 0.0
      %394 = vmatmul.mubr.f32.gmra.mxu0 %v272
      %v395 = vpop.f32.mrf.mxu0
      %v396 = vadd.f32 %v253, %v395
      %v397 = vpop.f32.mrf.mxu0
      %398 = vmatprep.mubr.f32.mxu0 0.0
      %399 = vmatmul.mubr.f32.gmra.mxu0 %v275
      %v400 = vpop.f32.mrf.mxu0
      %v401 = vadd.f32 %v253, %v400
      %v402 = vpop.f32.mrf.mxu0
      %403 = vmatprep.mubr.f32.mxu0 0.0
      %404 = vmatmul.mubr.f32.gmra.mxu0 %v278
      %v405 = vpop.f32.mrf.mxu0
      %v406 = vadd.f32 %v253, %v405
      %v407 = vpop.f32.mrf.mxu0
      %408 = vmatprep.mubr.f32.mxu0 0.0
      %409 = vmatmul.mubr.f32.gmra.mxu0 %v281
      %v410 = vpop.f32.mrf.mxu0
      %v411 = vadd.f32 %v253, %v410
      %v412 = vpop.f32.mrf.mxu0
      %413 = vmatprep.mubr.f32.mxu0 0.0
      %414 = vmatmul.mubr.f32.gmra.mxu0 %v284
      %v415 = vpop.f32.mrf.mxu0
      %v416 = vadd.f32 %v253, %v415
      %v417 = vpop.f32.mrf.mxu0
      %418 = vmatprep.mubr.f32.mxu0 0.0
      %419 = vmatmul.mubr.f32.gmra.mxu0 %v287
      %v420 = vpop.f32.mrf.mxu0
      %v421 = vadd.f32 %v253, %v420
      %v422 = vpop.f32.mrf.mxu0
      %423 = vmatprep.mubr.f32.mxu0 0.0
      %424 = vmatmul.mubr.f32.gmra.mxu0 %v290
      %v425 = vpop.f32.mrf.mxu0
      %v426 = vadd.f32 %v253, %v425
      %v427 = vpop.f32.mrf.mxu0
      %428 = vmatprep.mubr.f32.mxu0 0.0
      %429 = vmatmul.mubr.f32.gmra.mxu0 %v293
      %v430 = vpop.f32.mrf.mxu0
      %v431 = vadd.f32 %v253, %v430
      %v432 = vpop.f32.mrf.mxu0
      %433 = vmatprep.mubr.f32.mxu0 0.0
      %434 = vmatmul.mubr.f32.gmra.mxu0 %v296
      %v435 = vpop.f32.mrf.mxu0
      %v436 = vadd.f32 %v253, %v435
      %v437 = vpop.f32.mrf.mxu0
      %438 = vmatprep.mubr.f32.mxu0 0.0
      %439 = vmatmul.mubr.f32.gmra.mxu0 %v299
      %v440 = vpop.f32.mrf.mxu0
      %v441 = vadd.f32 %v253, %v440
      %v442 = vpop.f32.mrf.mxu0
      %443 = vmatprep.mubr.f32.mxu0 0.0
      %444 = vmatmul.mubr.f32.gmra.mxu0 %v302
      %v445 = vpop.f32.mrf.mxu0
      %v446 = vadd.f32 %v253, %v445
      %v447 = vpop.f32.mrf.mxu0
      %448 = vdwg.mxu0
      %v449 = vmax.f32 %v371, 0.0
      %v450 = vmax.f32 %v376, 0.0
      %v451 = vmax.f32 %v381, 0.0
      %v452 = vmax.f32 %v386, 0.0
      %v453 = vmax.f32 %v391, 0.0
      %v454 = vmax.f32 %v396, 0.0
      %v455 = vmax.f32 %v401, 0.0
      %v456 = vmax.f32 %v406, 0.0
      %v457 = vmax.f32 %v411, 0.0
      %v458 = vmax.f32 %v416, 0.0
      %v459 = vmax.f32 %v421, 0.0
      %v460 = vmax.f32 %v426, 0.0
      %v461 = vmax.f32 %v431, 0.0
      %v462 = vmax.f32 %v436, 0.0
      %v463 = vmax.f32 %v441, 0.0
      %v464 = vmax.f32 %v446, 0.0
      %v465 = vld [vmem:[%s3] sm:$0xff]
      %v466 = vld [vmem:[%s3 + $0x8] sm:$0xff]
      %v467 = vld [vmem:[%s3 + $0x10] sm:$0xff]
      %v468 = vld [vmem:[%s3 + $0x18] sm:$0xff]
      %v469 = vld [vmem:[%s3 + $0x20] sm:$0xff]
      %v470 = vld [vmem:[%s3 + $0x28] sm:$0xff]
      %v471 = vld [vmem:[%s3 + $0x30] sm:$0xff]
      %v472 = vld [vmem:[%s3 + $0x38] sm:$0xff]
      %v473 = vld [vmem:[%s3 + $0x40] sm:$0xff]
      %v474 = vld [vmem:[%s3 + $0x48] sm:$0xff]
      %v475 = vld [vmem:[%s3 + $0x50] sm:$0xff]
      %v476 = vld [vmem:[%s3 + $0x58] sm:$0xff]
      %v477 = vld [vmem:[%s3 + $0x60] sm:$0xff]
      %v478 = vld [vmem:[%s3 + $0x68] sm:$0xff]
      %v479 = vld [vmem:[%s3 + $0x70] sm:$0xff]
      %v480 = vld [vmem:[%s3 + $0x78] sm:$0xff]
      %v481 = vld [vmem:[%s4] sm:$0x1]
      %v483 = vlaneseq
      %v484 = vshrl.u32 %v483, 7
      %v485 = vsub.s32 0, %v484
      %v486 = vrot.slane %v481, %v485
      %488 = vmatprep.subr.mxu0 0.0
      %489 = vmatpush1.msra.mxu0 %v480
      %490 = vmatprep.subr.mxu0 0.0
      %491 = vmatpush1.msra.mxu0 %v479
      %492 = vmatprep.subr.mxu0 0.0
      %493 = vmatpush1.msra.mxu0 %v478
      %494 = vmatprep.subr.mxu0 0.0
      %495 = vmatpush1.msra.mxu0 %v477
      %496 = vmatprep.subr.mxu0 0.0
      %497 = vmatpush1.msra.mxu0 %v476
      %498 = vmatprep.subr.mxu0 0.0
      %499 = vmatpush1.msra.mxu0 %v475
      %500 = vmatprep.subr.mxu0 0.0
      %501 = vmatpush1.msra.mxu0 %v474
      %502 = vmatprep.subr.mxu0 0.0
      %503 = vmatpush1.msra.mxu0 %v473
      %504 = vmatprep.subr.mxu0 0.0
      %505 = vmatpush1.msra.mxu0 %v472
      %506 = vmatprep.subr.mxu0 0.0
      %507 = vmatpush1.msra.mxu0 %v471
      %508 = vmatprep.subr.mxu0 0.0
      %509 = vmatpush1.msra.mxu0 %v470
      %510 = vmatprep.subr.mxu0 0.0
      %511 = vmatpush1.msra.mxu0 %v469
      %512 = vmatprep.subr.mxu0 0.0
      %513 = vmatpush1.msra.mxu0 %v468
      %514 = vmatprep.subr.mxu0 0.0
      %515 = vmatpush1.msra.mxu0 %v467
      %516 = vmatprep.subr.mxu0 0.0
      %517 = vmatpush1.msra.mxu0 %v466
      %518 = vmatprep.subr.mxu0 0.0
      %519 = vmatpush1.msra.mxu0 %v465
      %520 = vmatprep.subr.mxu0 0.0
      %521 = vmatpush2.msra.mxu0 0.0
      %522 = vmatprep.subr.mxu0 0.0
      %523 = vmatpush2.msra.mxu0 0.0
      %524 = vmatprep.subr.mxu0 0.0
      %525 = vmatpush2.msra.mxu0 0.0
      %526 = vmatprep.subr.mxu0 0.0
      %527 = vmatpush2.msra.mxu0 0.0
      %528 = vmatprep.subr.mxu0 0.0
      %529 = vmatpush2.msra.mxu0 0.0
      %530 = vmatprep.subr.mxu0 0.0
      %531 = vmatpush2.msra.mxu0 0.0
      %532 = vmatprep.subr.mxu0 0.0
      %533 = vmatpush2.msra.mxu0 0.0
      %534 = vmatprep.subr.mxu0 0.0
      %535 = vmatpush2.msra.mxu0 0.0
      %536 = vmatprep.subr.mxu0 0.0
      %537 = vmatpush2.msra.mxu0 0.0
      %538 = vmatprep.subr.mxu0 0.0
      %539 = vmatpush2.msra.mxu0 0.0
      %540 = vmatprep.subr.mxu0 0.0
      %541 = vmatpush2.msra.mxu0 0.0
      %542 = vmatprep.subr.mxu0 0.0
      %543 = vmatpush2.msra.mxu0 0.0
      %544 = vmatprep.subr.mxu0 0.0
      %545 = vmatpush2.msra.mxu0 0.0
      %546 = vmatprep.subr.mxu0 0.0
      %547 = vmatpush2.msra.mxu0 0.0
      %548 = vmatprep.subr.mxu0 0.0
      %549 = vmatpush2.msra.mxu0 0.0
      %550 = vmatprep.subr.mxu0 0.0
      %551 = vmatpush2.msra.mxu0 0.0
      %552 = vmatprep.mubr.f32.mxu0 0.0
      %553 = vmatmul.mubr.f32.gmra.mxu0 %v449
      %v554 = vpop.f32.mrf.mxu0
      %v555 = vadd.f32 %v486, %v554
      %v556 = vpop.f32.mrf.mxu0
      %557 = vmatprep.mubr.f32.mxu0 0.0
      %558 = vmatmul.mubr.f32.gmra.mxu0 %v450
      %v559 = vpop.f32.mrf.mxu0
      %v560 = vadd.f32 %v486, %v559
      %v561 = vpop.f32.mrf.mxu0
      %562 = vmatprep.mubr.f32.mxu0 0.0
      %563 = vmatmul.mubr.f32.gmra.mxu0 %v451
      %v564 = vpop.f32.mrf.mxu0
      %v565 = vadd.f32 %v486, %v564
      %v566 = vpop.f32.mrf.mxu0
      %567 = vmatprep.mubr.f32.mxu0 0.0
      %568 = vmatmul.mubr.f32.gmra.mxu0 %v452
      %v569 = vpop.f32.mrf.mxu0
      %v570 = vadd.f32 %v486, %v569
      %v571 = vpop.f32.mrf.mxu0
      %572 = vmatprep.mubr.f32.mxu0 0.0
      %573 = vmatmul.mubr.f32.gmra.mxu0 %v453
      %v574 = vpop.f32.mrf.mxu0
      %v575 = vadd.f32 %v486, %v574
      %v576 = vpop.f32.mrf.mxu0
      %577 = vmatprep.mubr.f32.mxu0 0.0
      %578 = vmatmul.mubr.f32.gmra.mxu0 %v454
      %v579 = vpop.f32.mrf.mxu0
      %v580 = vadd.f32 %v486, %v579
      %v581 = vpop.f32.mrf.mxu0
      %582 = vmatprep.mubr.f32.mxu0 0.0
      %583 = vmatmul.mubr.f32.gmra.mxu0 %v455
      %v584 = vpop.f32.mrf.mxu0
      %v585 = vadd.f32 %v486, %v584
      %v586 = vpop.f32.mrf.mxu0
      %587 = vmatprep.mubr.f32.mxu0 0.0
      %588 = vmatmul.mubr.f32.gmra.mxu0 %v456
      %v589 = vpop.f32.mrf.mxu0
      %v590 = vadd.f32 %v486, %v589
      %v591 = vpop.f32.mrf.mxu0
      %592 = vmatprep.mubr.f32.mxu0 0.0
      %593 = vmatmul.mubr.f32.gmra.mxu0 %v457
      %v594 = vpop.f32.mrf.mxu0
      %v595 = vadd.f32 %v486, %v594
      %v596 = vpop.f32.mrf.mxu0
      %597 = vmatprep.mubr.f32.mxu0 0.0
      %598 = vmatmul.mubr.f32.gmra.mxu0 %v458
      %v599 = vpop.f32.mrf.mxu0
      %v600 = vadd.f32 %v486, %v599
      %v601 = vpop.f32.mrf.mxu0
      %602 = vmatprep.mubr.f32.mxu0 0.0
      %603 = vmatmul.mubr.f32.gmra.mxu0 %v459
      %v604 = vpop.f32.mrf.mxu0
      %v605 = vadd.f32 %v486, %v604
      %v606 = vpop.f32.mrf.mxu0
      %607 = vmatprep.mubr.f32.mxu0 0.0
      %608 = vmatmul.mubr.f32.gmra.mxu0 %v460
      %v609 = vpop.f32.mrf.mxu0
      %v610 = vadd.f32 %v486, %v609
      %v611 = vpop.f32.mrf.mxu0
      %612 = vmatprep.mubr.f32.mxu0 0.0
      %613 = vmatmul.mubr.f32.gmra.mxu0 %v461
      %v614 = vpop.f32.mrf.mxu0
      %v615 = vadd.f32 %v486, %v614
      %v616 = vpop.f32.mrf.mxu0
      %617 = vmatprep.mubr.f32.mxu0 0.0
      %618 = vmatmul.mubr.f32.gmra.mxu0 %v462
      %v619 = vpop.f32.mrf.mxu0
      %v620 = vadd.f32 %v486, %v619
      %v621 = vpop.f32.mrf.mxu0
      %622 = vmatprep.mubr.f32.mxu0 0.0
      %623 = vmatmul.mubr.f32.gmra.mxu0 %v463
      %v624 = vpop.f32.mrf.mxu0
      %v625 = vadd.f32 %v486, %v624
      %v626 = vpop.f32.mrf.mxu0
      %627 = vmatprep.mubr.f32.mxu0 0.0
      %628 = vmatmul.mubr.f32.gmra.mxu0 %v464
      %v629 = vpop.f32.mrf.mxu0
      %v630 = vadd.f32 %v486, %v629
      %v631 = vpop.f32.mrf.mxu0
      %632 = vdwg.mxu0
      %v633 = vtanh.pop %v555
      %v634 = vtanh.pop %v560
      %v635 = vtanh.pop %v565
      %v636 = vtanh.pop %v570
      %v637 = vtanh.pop %v575
      %v638 = vtanh.pop %v580
      %v639 = vtanh.pop %v585
      %v640 = vtanh.pop %v590
      %v641 = vtanh.pop %v595
      %v642 = vtanh.pop %v600
      %v643 = vtanh.pop %v605
      %v644 = vtanh.pop %v610
      %v645 = vtanh.pop %v615
      %v646 = vtanh.pop %v620
      %v647 = vtanh.pop %v625
      %v648 = vtanh.pop %v630
      %649 = vst.msk [vmem:[%s226] sm:$0xff] %vm255, %v633
      %650 = vst.msk [vmem:[%s226 + $0x8] sm:$0xff] %vm255, %v634
      %651 = vst.msk [vmem:[%s226 + $0x10] sm:$0xff] %vm255, %v635
      %652 = vst.msk [vmem:[%s226 + $0x18] sm:$0xff] %vm255, %v636
      %653 = vst.msk [vmem:[%s226 + $0x20] sm:$0xff] %vm255, %v637
      %654 = vst.msk [vmem:[%s226 + $0x28] sm:$0xff] %vm255, %v638
      %655 = vst.msk [vmem:[%s226 + $0x30] sm:$0xff] %vm255, %v639
      %656 = vst.msk [vmem:[%s226 + $0x38] sm:$0xff] %vm255, %v640
      %657 = vst.msk [vmem:[%s226 + $0x40] sm:$0xff] %vm255, %v641
      %658 = vst.msk [vmem:[%s226 + $0x48] sm:$0xff] %vm255, %v642
      %659 = vst.msk [vmem:[%s226 + $0x50] sm:$0xff] %vm255, %v643
      %660 = vst.msk [vmem:[%s226 + $0x58] sm:$0xff] %vm255, %v644
      %661 = vst.msk [vmem:[%s226 + $0x60] sm:$0xff] %vm255, %v645
      %662 = vst.msk [vmem:[%s226 + $0x68] sm:$0xff] %vm255, %v646
      %663 = vst.msk [vmem:[%s226 + $0x70] sm:$0xff] %vm255, %v647
      %664 = vst.msk [vmem:[%s226 + $0x78] sm:$0xff] %vm255, %v648
      %s665 = smul.u32 16, %s16
      %p666 = scmp.lt.s32.totalorder %s665, 31
      %s667 = scalar_select %p666, %s665, 31
      %s668 = smul.addr %s667, 8
      %s669 = scalar_lea.vmem %s5, %s668
      // Predicated region
      $region41: #{tpu_custom_call.1} parent=39 // pred_check
        %p670 = pneg %p144
      $region42: #{tpu_custom_call.1} parent=39 // pred_check_branch
        %672 = sbr.rel (%p670) target = $region44
      $region43: #{tpu_custom_call.1} parent=39 // pred_region
        %s673 = smul.u32 16, %s16
      $region44: #{tpu_custom_call.1} parent=39 // pred_fallthru
        _
    $region40: #{tpu_custom_call.1} parent=5 // pred_fallthru
      _
    %p674 = scmp.le.s32.totalorder 2, %s11
    // Predicated region
    $region45: #{tpu_custom_call.1} parent=5 // pred_check
      %p675 = pneg %p674
    $region46: #{tpu_custom_call.1} parent=5 // pred_check_branch
      %677 = sbr.rel (%p675) target = $region48
    $region47: #{tpu_custom_call.1} parent=5 // pred_region
      %s678 = ssub.s32 %s11, 2
      // Predicated region
      $region49: #{tpu_custom_call.1} parent=47 // pred_check
        %p679 = pneg %p150
      $region50: #{tpu_custom_call.1} parent=47 // pred_check_branch
        %681 = sbr.rel (%p679) target = $region52
      $region51: #{tpu_custom_call.1} parent=47 // pred_region
        %s682 = smul.u32 16, %s17
        %p683 = scmp.lt.s32.totalorder %s682, 31
        %s684 = scalar_select %p683, %s682, 31
        %s685 = smul.addr %s684, 8
        %s686 = scalar_lea.vmem %s5, %s685
      $region52: #{tpu_custom_call.1} parent=47 // pred_fallthru
        _
    $region48: #{tpu_custom_call.1} parent=5 // pred_fallthru
      _
  $region6: #{tpu_custom_call.1} parent=0 // loop_footer
    %s15 = sadd.s32 1, %s11
  $region7: #{tpu_custom_call.1} parent=0 // loop_footer_branch
    %10 = sbr.rel target = $region3
  $region8: #{tpu_custom_call.1} parent=0 // loop_exit
    _

</llo_original>
